<compile_context>
chip_gen: v5e
topology: v5e:2x2
jax: 0.10.0
libtpu: 0.0.40
codegen_flags: <defaults>
</compile_context>

<pallas_src>
import functools

import jax
import jax.numpy as jnp
from jax.experimental import pallas as pl
from jax.experimental.pallas import tpu as pltpu


def _scan_over_time_kernel(pre_x_ref, h0_ref, whh_ref, states_ref, h_scratch,
                           *, t_blk):
    """One grid step == one (batch block, time block) of the recurrence.

    pre_x_ref:  (b_blk, t_blk, D_h)  precomputed x_t @ W_xh + b_h
    h0_ref:     (b_blk, D_h)         initial state for this batch block
    whh_ref:    (D_h, D_h)           recurrent weight (resident)
    states_ref: (b_blk, t_blk, D_h)  per-block state output slab
    h_scratch:  (b_blk, D_h) f32     carried hidden state (persists across grid)
    """
    tb = pl.program_id(1)  # time-block index (inner, sequential axis)

    # New batch block always starts at tb == 0 -> (re)load the initial state.
    @pl.when(tb == 0)
    def _():
        h_scratch[...] = h0_ref[...].astype(jnp.float32)

    w_hh = whh_ref[...]
    h = h_scratch[...]                      # f32 carry

    # Statically unrolled recurrence over the time block (t is a Python int,
    # so all slices are static).
    for t in range(t_blk):
        pre = (pre_x_ref[:, t, :].astype(jnp.float32)
               + jnp.dot(h.astype(w_hh.dtype), w_hh,
                         preferred_element_type=jnp.float32))
        h = jnp.tanh(pre)
        states_ref[:, t, :] = h.astype(states_ref.dtype)

    h_scratch[...] = h


def scan_over_time(initial_state, inputs, params, *, t_blk=None, b_blk=None):
    """Pallas ScanOverTime forward.

    initial_state: [B, D_h]
    inputs:        [B, T, D_in]   (batch-first, time axis=1, like PyTorch)
    returns dict mimicking merge_dict_trees(outputs, axis=1):
        {"state_predicted": [B, T, D_h], "features": [B, T, D_out]}
    """
    w_xh, w_hh, b_h, w_out, b_out = (params["w_xh"], params["w_hh"],
                                     params["b_h"], params["w_out"],
                                     params["b_out"])
    B, T, D_in = inputs.shape
    D_h = initial_state.shape[-1]
    D_out = w_out.shape[-1]

    # ---- Hoisted input projection: one batched (B*T, D_in) @ (D_in, D_h)
    #      matmul, fully parallel over time, off the serial critical path.
    pre_x = jnp.einsum("btd,dh->bth", inputs, w_xh,
                       preferred_element_type=jnp.float32) + b_h
    pre_x = pre_x.astype(inputs.dtype)                       # [B, T, D_h]

    # ---- Block sizes (time block must be a multiple of 8 or the full T).
    if t_blk is None:
        t_blk = T
    if b_blk is None:
        b_blk = B
    assert T % t_blk == 0 and B % b_blk == 0
    n_b, n_t = B // b_blk, T // t_blk

    kernel = functools.partial(_scan_over_time_kernel, t_blk=t_blk)

    grid_spec = pltpu.PrefetchScalarGridSpec(
        num_scalar_prefetch=0,
        grid=(n_b, n_t),                                     # time = inner axis
        in_specs=[
            pl.BlockSpec((b_blk, t_blk, D_h), lambda b, tb: (b, tb, 0)),  # pre_x
            pl.BlockSpec((b_blk, D_h), lambda b, tb: (b, 0)),             # h0
            pl.BlockSpec((D_h, D_h), lambda b, tb: (0, 0)),               # W_hh
        ],
        out_specs=pl.BlockSpec((b_blk, t_blk, D_h), lambda b, tb: (b, tb, 0)),
        scratch_shapes=[pltpu.VMEM((b_blk, D_h), jnp.float32)],
    )

    states = pl.pallas_call(
        kernel,
        out_shape=jax.ShapeDtypeStruct((B, T, D_h), inputs.dtype),
        grid_spec=grid_spec,
        compiler_params=pltpu.CompilerParams(
            # batch blocks are independent (megacore-shardable); the time
            # recurrence must run sequentially.
            dimension_semantics=("parallel", "arbitrary")),
    )(pre_x, initial_state, w_hh)

    # ---- Hoisted output projection: one batched (B*T, D_h) @ (D_h, D_out)
    #      matmul, fully parallel (no reason to serialize it in the scan).
    feats = (jnp.einsum("bth,hd->btd", states, w_out,
                        preferred_element_type=jnp.float32)
             + b_out).astype(inputs.dtype)

    # merge_dict_trees(outputs, axis=1): per-step dicts stacked along axis=1.
    return {"state_predicted": states, "features": feats}


def _reference(initial_state, inputs, params):
    """Pure-JAX reference matching the PyTorch python loop."""
    w_xh, w_hh, b_h, w_out, b_out = (params["w_xh"], params["w_hh"],
                                     params["b_h"], params["w_out"],
                                     params["b_out"])
    B, T, _ = inputs.shape
    state = initial_state
    states, feats = [], []
    for t in range(T):
        pre = inputs[:, t] @ w_xh + state @ w_hh + b_h
        state = jnp.tanh(pre)
        feats.append(state @ w_out + b_out)
        states.append(state)
    return {
        "state_predicted": jnp.stack(states, axis=1),
        "features": jnp.stack(feats, axis=1),
    }


if __name__ == "__main__":
    B, T, D_in, D_h, D_out = 2, 16, 32, 32, 32
    key = jax.random.PRNGKey(0)
    k_x, k_h0, k1, k2, k3, k4, k5 = jax.random.split(key, 7)

    inputs = jax.random.normal(k_x, (B, T, D_in), dtype=jnp.float32)
    initial_state = jax.random.normal(k_h0, (B, D_h), dtype=jnp.float32)

    params = {
        "w_xh": 0.1 * jax.random.normal(k1, (D_in, D_h), dtype=jnp.float32),
        "w_hh": 0.1 * jax.random.normal(k2, (D_h, D_h), dtype=jnp.float32),
        "b_h": 0.01 * jax.random.normal(k3, (1, D_h), dtype=jnp.float32),
        "w_out": 0.1 * jax.random.normal(k4, (D_h, D_out), dtype=jnp.float32),
        "b_out": 0.01 * jax.random.normal(k5, (1, D_out), dtype=jnp.float32),
    }

    # t_blk=8 -> two time blocks, exercising the scratch-carried recurrence
    # across grid steps.
    out = scan_over_time(initial_state, inputs, params, t_blk=8)
    jax.block_until_ready(out)

    ref = _reference(initial_state, inputs, params)
    for k in ("state_predicted", "features"):
        assert out[k].shape == ref[k].shape, k
        assert jnp.allclose(out[k], ref[k], atol=1e-5, rtol=1e-5), k

    print("KERNEL_OK")
</pallas_src>

<mosaic_0001>
module attributes {stable_mosaic.version = 11 : i64} {
  func.func @_scan_over_time_kernel(%arg0: i32, %arg1: i32, %arg2: memref<2x8x32xf32, #tpu.memory_space<vmem>>, %arg3: memref<2x32xf32, #tpu.memory_space<vmem>>, %arg4: memref<32x32xf32, #tpu.memory_space<vmem>>, %arg5: memref<2x8x32xf32, #tpu.memory_space<vmem>>, %arg6: memref<2x32xf32, #tpu.memory_space<vmem>>) attributes {dimension_semantics = [#tpu.dimension_semantics<parallel>, #tpu.dimension_semantics<arbitrary>], iteration_bounds = array<i64: 1, 2>, scalar_prefetch = 0 : i64, scratch_operands = 1 : i64, tpu.core_type = #tpu.core_type<tc>, window_params = [{transform_indices = @transform_0, window_bounds = array<i64: 2, 8, 32>}, {transform_indices = @transform_1, window_bounds = array<i64: 2, 32>}, {pipeline_mode = #tpu.pipeline_mode<synchronous>, transform_indices = @transform_2, window_bounds = array<i64: 32, 32>}, {transform_indices = @transform_3, window_bounds = array<i64: 2, 8, 32>}]} {
    %c0_i32 = arith.constant 0 : i32
    %0 = arith.cmpi eq, %arg1, %c0_i32 : i32
    %1 = arith.extui %0 : i1 to i32
    %c0_i32_0 = arith.constant 0 : i32
    %2 = arith.cmpi ne, %1, %c0_i32_0 : i32
    scf.if %2 {
      %c0_54 = arith.constant 0 : index
      %c0_55 = arith.constant 0 : index
      %70 = vector.load %arg3[%c0_54, %c0_55] : memref<2x32xf32, #tpu.memory_space<vmem>>, vector<2x32xf32>
      %c0_56 = arith.constant 0 : index
      %c0_57 = arith.constant 0 : index
      %71 = vector.load %arg6[%c0_56, %c0_57] : memref<2x32xf32, #tpu.memory_space<vmem>>, vector<2x32xf32>
      tpu.vector_store %arg6[%c0_56, %c0_57], %70 {strides = array<i32>} : memref<2x32xf32, #tpu.memory_space<vmem>>, vector<2x32xf32>,
    } else {
    }
    %c0 = arith.constant 0 : index
    %c0_1 = arith.constant 0 : index
    %3 = vector.load %arg4[%c0, %c0_1] : memref<32x32xf32, #tpu.memory_space<vmem>>, vector<32x32xf32>
    %c0_2 = arith.constant 0 : index
    %c0_3 = arith.constant 0 : index
    %4 = vector.load %arg6[%c0_2, %c0_3] : memref<2x32xf32, #tpu.memory_space<vmem>>, vector<2x32xf32>
    %c0_4 = arith.constant 0 : index
    %c0_5 = arith.constant 0 : index
    %c0_6 = arith.constant 0 : index
    %5 = vector.load %arg2[%c0_4, %c0_5, %c0_6] : memref<2x8x32xf32, #tpu.memory_space<vmem>>, vector<2x1x32xf32>
    %6 = vector.shape_cast %5 : vector<2x1x32xf32> to vector<2x32xf32>
    %cst = arith.constant dense<0.000000e+00> : vector<2x32xf32>
    %7 = tpu.matmul %4, %3, %cst {dimension_numbers = #tpu.dot_dimension_numbers<[1], [0], [0], [1], [0, 0, 1, 1], [], []>} : vector<2x32xf32>, vector<32x32xf32>, vector<2x32xf32> -> vector<2x32xf32>
    %8 = arith.addf %6, %7 : vector<2x32xf32>
    %9 = math.tanh %8 : vector<2x32xf32>
    %c0_7 = arith.constant 0 : index
    %c0_8 = arith.constant 0 : index
    %c0_9 = arith.constant 0 : index
    %10 = vector.load %arg5[%c0_7, %c0_8, %c0_9] : memref<2x8x32xf32, #tpu.memory_space<vmem>>, vector<2x1x32xf32>
    %11 = vector.shape_cast %10 : vector<2x1x32xf32> to vector<2x32xf32>
    %12 = vector.shape_cast %9 : vector<2x32xf32> to vector<2x1x32xf32>
    tpu.vector_store %arg5[%c0_7, %c0_8, %c0_9], %12 {strides = array<i32>} : memref<2x8x32xf32, #tpu.memory_space<vmem>>, vector<2x1x32xf32>,
    %c0_10 = arith.constant 0 : index
    %c1 = arith.constant 1 : index
    %c0_11 = arith.constant 0 : index
    %13 = vector.load %arg2[%c0_10, %c1, %c0_11] : memref<2x8x32xf32, #tpu.memory_space<vmem>>, vector<2x1x32xf32>
    %14 = vector.shape_cast %13 : vector<2x1x32xf32> to vector<2x32xf32>
    %cst_12 = arith.constant dense<0.000000e+00> : vector<2x32xf32>
    %15 = tpu.matmul %9, %3, %cst_12 {dimension_numbers = #tpu.dot_dimension_numbers<[1], [0], [0], [1], [0, 0, 1, 1], [], []>} : vector<2x32xf32>, vector<32x32xf32>, vector<2x32xf32> -> vector<2x32xf32>
    %16 = arith.addf %14, %15 : vector<2x32xf32>
    %17 = math.tanh %16 : vector<2x32xf32>
    %c0_13 = arith.constant 0 : index
    %c1_14 = arith.constant 1 : index
    %c0_15 = arith.constant 0 : index
    %18 = vector.load %arg5[%c0_13, %c1_14, %c0_15] : memref<2x8x32xf32, #tpu.memory_space<vmem>>, vector<2x1x32xf32>
    %19 = vector.shape_cast %18 : vector<2x1x32xf32> to vector<2x32xf32>
    %20 = vector.shape_cast %17 : vector<2x32xf32> to vector<2x1x32xf32>
    tpu.vector_store %arg5[%c0_13, %c1_14, %c0_15], %20 {strides = array<i32>} : memref<2x8x32xf32, #tpu.memory_space<vmem>>, vector<2x1x32xf32>,
    %c0_16 = arith.constant 0 : index
    %c2 = arith.constant 2 : index
    %c0_17 = arith.constant 0 : index
    %21 = vector.load %arg2[%c0_16, %c2, %c0_17] : memref<2x8x32xf32, #tpu.memory_space<vmem>>, vector<2x1x32xf32>
    %22 = vector.shape_cast %21 : vector<2x1x32xf32> to vector<2x32xf32>
    %cst_18 = arith.constant dense<0.000000e+00> : vector<2x32xf32>
    %23 = tpu.matmul %17, %3, %cst_18 {dimension_numbers = #tpu.dot_dimension_numbers<[1], [0], [0], [1], [0, 0, 1, 1], [], []>} : vector<2x32xf32>, vector<32x32xf32>, vector<2x32xf32> -> vector<2x32xf32>
    %24 = arith.addf %22, %23 : vector<2x32xf32>
    %25 = math.tanh %24 : vector<2x32xf32>
    %c0_19 = arith.constant 0 : index
    %c2_20 = arith.constant 2 : index
    %c0_21 = arith.constant 0 : index
    %26 = vector.load %arg5[%c0_19, %c2_20, %c0_21] : memref<2x8x32xf32, #tpu.memory_space<vmem>>, vector<2x1x32xf32>
    %27 = vector.shape_cast %26 : vector<2x1x32xf32> to vector<2x32xf32>
    %28 = vector.shape_cast %25 : vector<2x32xf32> to vector<2x1x32xf32>
    tpu.vector_store %arg5[%c0_19, %c2_20, %c0_21], %28 {strides = array<i32>} : memref<2x8x32xf32, #tpu.memory_space<vmem>>, vector<2x1x32xf32>,
    %c0_22 = arith.constant 0 : index
    %c3 = arith.constant 3 : index
    %c0_23 = arith.constant 0 : index
    %29 = vector.load %arg2[%c0_22, %c3, %c0_23] : memref<2x8x32xf32, #tpu.memory_space<vmem>>, vector<2x1x32xf32>
    %30 = vector.shape_cast %29 : vector<2x1x32xf32> to vector<2x32xf32>
    %cst_24 = arith.constant dense<0.000000e+00> : vector<2x32xf32>
    %31 = tpu.matmul %25, %3, %cst_24 {dimension_numbers = #tpu.dot_dimension_numbers<[1], [0], [0], [1], [0, 0, 1, 1], [], []>} : vector<2x32xf32>, vector<32x32xf32>, vector<2x32xf32> -> vector<2x32xf32>
    %32 = arith.addf %30, %31 : vector<2x32xf32>
    %33 = math.tanh %32 : vector<2x32xf32>
    %c0_25 = arith.constant 0 : index
    %c3_26 = arith.constant 3 : index
    %c0_27 = arith.constant 0 : index
    %34 = vector.load %arg5[%c0_25, %c3_26, %c0_27] : memref<2x8x32xf32, #tpu.memory_space<vmem>>, vector<2x1x32xf32>
    %35 = vector.shape_cast %34 : vector<2x1x32xf32> to vector<2x32xf32>
    %36 = vector.shape_cast %33 : vector<2x32xf32> to vector<2x1x32xf32>
    tpu.vector_store %arg5[%c0_25, %c3_26, %c0_27], %36 {strides = array<i32>} : memref<2x8x32xf32, #tpu.memory_space<vmem>>, vector<2x1x32xf32>,
    %c0_28 = arith.constant 0 : index
    %c4 = arith.constant 4 : index
    %c0_29 = arith.constant 0 : index
    %37 = vector.load %arg2[%c0_28, %c4, %c0_29] : memref<2x8x32xf32, #tpu.memory_space<vmem>>, vector<2x1x32xf32>
    %38 = vector.shape_cast %37 : vector<2x1x32xf32> to vector<2x32xf32>
    %cst_30 = arith.constant dense<0.000000e+00> : vector<2x32xf32>
    %39 = tpu.matmul %33, %3, %cst_30 {dimension_numbers = #tpu.dot_dimension_numbers<[1], [0], [0], [1], [0, 0, 1, 1], [], []>} : vector<2x32xf32>, vector<32x32xf32>, vector<2x32xf32> -> vector<2x32xf32>
    %40 = arith.addf %38, %39 : vector<2x32xf32>
    %41 = math.tanh %40 : vector<2x32xf32>
    %c0_31 = arith.constant 0 : index
    %c4_32 = arith.constant 4 : index
    %c0_33 = arith.constant 0 : index
    %42 = vector.load %arg5[%c0_31, %c4_32, %c0_33] : memref<2x8x32xf32, #tpu.memory_space<vmem>>, vector<2x1x32xf32>
    %43 = vector.shape_cast %42 : vector<2x1x32xf32> to vector<2x32xf32>
    %44 = vector.shape_cast %41 : vector<2x32xf32> to vector<2x1x32xf32>
    tpu.vector_store %arg5[%c0_31, %c4_32, %c0_33], %44 {strides = array<i32>} : memref<2x8x32xf32, #tpu.memory_space<vmem>>, vector<2x1x32xf32>,
    %c0_34 = arith.constant 0 : index
    %c5 = arith.constant 5 : index
    %c0_35 = arith.constant 0 : index
    %45 = vector.load %arg2[%c0_34, %c5, %c0_35] : memref<2x8x32xf32, #tpu.memory_space<vmem>>, vector<2x1x32xf32>
    %46 = vector.shape_cast %45 : vector<2x1x32xf32> to vector<2x32xf32>
    %cst_36 = arith.constant dense<0.000000e+00> : vector<2x32xf32>
    %47 = tpu.matmul %41, %3, %cst_36 {dimension_numbers = #tpu.dot_dimension_numbers<[1], [0], [0], [1], [0, 0, 1, 1], [], []>} : vector<2x32xf32>, vector<32x32xf32>, vector<2x32xf32> -> vector<2x32xf32>
    %48 = arith.addf %46, %47 : vector<2x32xf32>
    %49 = math.tanh %48 : vector<2x32xf32>
    %c0_37 = arith.constant 0 : index
    %c5_38 = arith.constant 5 : index
    %c0_39 = arith.constant 0 : index
    %50 = vector.load %arg5[%c0_37, %c5_38, %c0_39] : memref<2x8x32xf32, #tpu.memory_space<vmem>>, vector<2x1x32xf32>
    %51 = vector.shape_cast %50 : vector<2x1x32xf32> to vector<2x32xf32>
    %52 = vector.shape_cast %49 : vector<2x32xf32> to vector<2x1x32xf32>
    tpu.vector_store %arg5[%c0_37, %c5_38, %c0_39], %52 {strides = array<i32>} : memref<2x8x32xf32, #tpu.memory_space<vmem>>, vector<2x1x32xf32>,
    %c0_40 = arith.constant 0 : index
    %c6 = arith.constant 6 : index
    %c0_41 = arith.constant 0 : index
    %53 = vector.load %arg2[%c0_40, %c6, %c0_41] : memref<2x8x32xf32, #tpu.memory_space<vmem>>, vector<2x1x32xf32>
    %54 = vector.shape_cast %53 : vector<2x1x32xf32> to vector<2x32xf32>
    %cst_42 = arith.constant dense<0.000000e+00> : vector<2x32xf32>
    %55 = tpu.matmul %49, %3, %cst_42 {dimension_numbers = #tpu.dot_dimension_numbers<[1], [0], [0], [1], [0, 0, 1, 1], [], []>} : vector<2x32xf32>, vector<32x32xf32>, vector<2x32xf32> -> vector<2x32xf32>
    %56 = arith.addf %54, %55 : vector<2x32xf32>
    %57 = math.tanh %56 : vector<2x32xf32>
    %c0_43 = arith.constant 0 : index
    %c6_44 = arith.constant 6 : index
    %c0_45 = arith.constant 0 : index
    %58 = vector.load %arg5[%c0_43, %c6_44, %c0_45] : memref<2x8x32xf32, #tpu.memory_space<vmem>>, vector<2x1x32xf32>
    %59 = vector.shape_cast %58 : vector<2x1x32xf32> to vector<2x32xf32>
    %60 = vector.shape_cast %57 : vector<2x32xf32> to vector<2x1x32xf32>
    tpu.vector_store %arg5[%c0_43, %c6_44, %c0_45], %60 {strides = array<i32>} : memref<2x8x32xf32, #tpu.memory_space<vmem>>, vector<2x1x32xf32>,
    %c0_46 = arith.constant 0 : index
    %c7 = arith.constant 7 : index
    %c0_47 = arith.constant 0 : index
    %61 = vector.load %arg2[%c0_46, %c7, %c0_47] : memref<2x8x32xf32, #tpu.memory_space<vmem>>, vector<2x1x32xf32>
    %62 = vector.shape_cast %61 : vector<2x1x32xf32> to vector<2x32xf32>
    %cst_48 = arith.constant dense<0.000000e+00> : vector<2x32xf32>
    %63 = tpu.matmul %57, %3, %cst_48 {dimension_numbers = #tpu.dot_dimension_numbers<[1], [0], [0], [1], [0, 0, 1, 1], [], []>} : vector<2x32xf32>, vector<32x32xf32>, vector<2x32xf32> -> vector<2x32xf32>
    %64 = arith.addf %62, %63 : vector<2x32xf32>
    %65 = math.tanh %64 : vector<2x32xf32>
    %c0_49 = arith.constant 0 : index
    %c7_50 = arith.constant 7 : index
    %c0_51 = arith.constant 0 : index
    %66 = vector.load %arg5[%c0_49, %c7_50, %c0_51] : memref<2x8x32xf32, #tpu.memory_space<vmem>>, vector<2x1x32xf32>
    %67 = vector.shape_cast %66 : vector<2x1x32xf32> to vector<2x32xf32>
    %68 = vector.shape_cast %65 : vector<2x32xf32> to vector<2x1x32xf32>
    tpu.vector_store %arg5[%c0_49, %c7_50, %c0_51], %68 {strides = array<i32>} : memref<2x8x32xf32, #tpu.memory_space<vmem>>, vector<2x1x32xf32>,
    %c0_52 = arith.constant 0 : index
    %c0_53 = arith.constant 0 : index
    %69 = vector.load %arg6[%c0_52, %c0_53] : memref<2x32xf32, #tpu.memory_space<vmem>>, vector<2x32xf32>
    tpu.vector_store %arg6[%c0_52, %c0_53], %65 {strides = array<i32>} : memref<2x32xf32, #tpu.memory_space<vmem>>, vector<2x32xf32>,
    return
  }
  func.func @transform_0(%arg0: i32, %arg1: i32) -> (i32, i32, i32) {
    %c0_i32 = arith.constant 0 : i32
    %c0_i32_0 = arith.constant 0 : i32
    return %arg0, %arg1, %c0_i32 : i32, i32, i32
  }
  func.func @transform_1(%arg0: i32, %arg1: i32) -> (i32, i32) {
    %c0_i32 = arith.constant 0 : i32
    %c0_i32_0 = arith.constant 0 : i32
    return %arg0, %c0_i32 : i32, i32
  }
  func.func @transform_2(%arg0: i32, %arg1: i32) -> (i32, i32) {
    %c0_i32 = arith.constant 0 : i32
    %c0_i32_0 = arith.constant 0 : i32
    %c0_i32_1 = arith.constant 0 : i32
    return %c0_i32, %c0_i32_0 : i32, i32
  }
  func.func @transform_3(%arg0: i32, %arg1: i32) -> (i32, i32, i32) {
    %c0_i32 = arith.constant 0 : i32
    %c0_i32_0 = arith.constant 0 : i32
    return %arg0, %arg1, %c0_i32 : i32, i32, i32
  }
}

</mosaic_0001>

<llo_original>
// kernel: tpu_custom_call.1
$region0: #{tpu_custom_call.1}
  #allocation0 [shape = 'u32[]', space=smem, size = 0x4, offset = 0x4, fixed_abs, tag = 'smem constant byte address 0x4 - core index']
  #allocation1 [shape = 'u32[72,128]{1,0:T(1,128)}', space=vmem, size = 0x9000, scoped, tag = 'internal scratch']
  #allocation2 [shape = 'f32[2,32]{1,0:T(2,128)}', space=vmem, size = 0x400, scoped, tag = 'scratch operand']
  %s0 = inlined_call_operand.hbm [shape: f32[2,16,32], index: 0, kind: input, shape index: {}]
  %s1 = inlined_call_operand.hbm [shape: f32[2,32], index: 1, kind: input, shape index: {}]
  %s2 = inlined_call_operand.hbm [shape: f32[32,32], index: 2, kind: input, shape index: {}]
  %s3 = inlined_call_operand.hbm [shape: f32[2,16,32], index: 3, kind: output, shape index: {}]
  %s4 = sld [smem:[#allocation0]]
  $region61: #{tpu_custom_call.1} parent=0
    _
  %s6 = ssub.s32 1, %s4
  %s7 = scalar_select 0, %s6, %s4
  $region1: #{tpu_custom_call.1} parent=0
    #allocation3 [shape = 'u8[16384]{0}', space=vmem, size = 0x4000, scoped, tag = 'input window, operand 0']
    #allocation4 [shape = 's32[2]{0}', space=sflag, size = 0x8, scoped, tag = 'scoped memory for tpu_custom_call.1']
    #allocation5 [shape = 's32[2]{0}', space=sflag, size = 0x8, scoped, tag = 'scoped memory for tpu_custom_call.1']
    #allocation6 [shape = 'u8[1024]{0}', space=vmem, size = 0x400, scoped, tag = 'input window, operand 1, single buffered']
    #allocation7 [shape = 's32[1]{0}', space=sflag, size = 0x4, scoped, tag = 'scoped memory for tpu_custom_call.1']
    #allocation8 [shape = 'u8[16384]{0}', space=vmem, size = 0x4000, scoped, tag = 'input window, operand 2, single buffered']
    #allocation9 [shape = 'u8[16384]{0}', space=vmem, size = 0x4000, scoped, tag = 'output window, operand 0']
    %8 = vsyncpa [#allocation4], 0
    %s9 = scalar_lea.sflag [#allocation4], 1
    %10 = vsyncpa %s9, 0
    %11 = vsyncpa [#allocation7], 0
    %12 = vsyncpa [#allocation5], 0
    %s13 = scalar_lea.sflag [#allocation5], 1
    %14 = vsyncpa %s13, 0
    loop: start=0, step=1, limit=4
    $region2: #{tpu_custom_call.1} parent=1 // loop_pre_header
      _
    $region3: #{tpu_custom_call.1} parent=1 // loop_header
      %s16 = sphi 0, %s20
      %p17 = scmp.ge.s32.totalorder %s16, 4
      %s23 = sphi 0, %s35
      %s24 = sphi 0, %s31
      %s25 = sphi 0, %s23
      %s26 = sphi 0, %s24
      %s27 = sphi 0, %s25
      %s28 = sphi 0, %s26
      %s40 = sphi 0, %s42
      %s43 = sphi 0, %s40
      %s44 = sphi 0, %s43
      %s60 = sphi 0, %s44
      %s66 = sphi 0, %s68
      %s69 = sphi 0, %s66
      %s70 = sphi 0, %s69
      %s86 = sphi 0, %s70
      %s90 = sphi 0, %s90
      %s92 = sphi 0, %s90
      %s93 = sphi 0, %s92
      %s107 = sphi 0, %s93
      %s115 = sphi 0, %s117
      %s118 = sphi 0, %s115
      %s119 = sphi 0, %s118
      %s135 = sphi 0, %s119
    $region4: #{tpu_custom_call.1} parent=1 // loop_header_branch
      %19 = sbr.rel (%p17) target = $region8
    $region5: #{tpu_custom_call.1} parent=1 // loop_body
      %s21 = ssub.s32 %s16, 1
      %s22 = ssub.s32 %s16, 2
      %s29 = sadd.s32 1, %s24
      %p30 = scmp.ge.s32.totalorder %s29, 2
      %s31 = scalar_select %p30, 0, %s29
      %s32 = sadd.s32 1, %s23
      %s33 = scalar_select %p30, %s32, %s23
      %p34 = scmp.ge.s32.totalorder %s33, 1
      %s35 = scalar_select %p34, 0, %s33
      %s36 = ssub.s32 %s23, %s35
      %s37 = ssub.s32 %s24, %s31
      %s38 = sor.u32 %s36, %s37
      %p39 = scmp.eq.s32.totalorder %s38, 0
      %s41 = sadd.s32 %s40, 1
      %s42 = scalar_select %p39, %s40, %s41
      %p45 = pneg %p39
      %p46 = scmp.eq.s32.totalorder %s16, 1
      %p47 = por %p45, %p46
      %p48 = scmp.ne.s32.totalorder %s40, %s43
      %p49 = scmp.eq.s32.totalorder %s16, 0
      %p50 = por %p48, %p49
      %p51 = scmp.ne.s32.totalorder %s40, %s43
      %p52 = scmp.eq.s32.totalorder %s21, 1
      %p53 = por %p51, %p52
      %p54 = scmp.ne.s32.totalorder %s43, %s44
      %p55 = scmp.eq.s32.totalorder %s21, 0
      %p56 = por %p54, %p55
      %p57 = scmp.ne.s32.totalorder %s43, %s44
      %p58 = scmp.eq.s32.totalorder %s22, 1
      %p59 = por %p57, %p58
      %p61 = scmp.ne.s32.totalorder %s44, %s60
      %p62 = scmp.eq.s32.totalorder %s22, 0
      %p63 = por %p61, %p62
      %s64 = ssub.s32 %s23, %s35
      %p65 = scmp.eq.s32.totalorder %s64, 0
      %s67 = sadd.s32 %s66, 1
      %s68 = scalar_select %p65, %s66, %s67
      %p71 = pneg %p65
      %p72 = scmp.eq.s32.totalorder %s16, 1
      %p73 = por %p71, %p72
      %p74 = scmp.ne.s32.totalorder %s66, %s69
      %p75 = scmp.eq.s32.totalorder %s16, 0
      %p76 = por %p74, %p75
      %p77 = scmp.ne.s32.totalorder %s66, %s69
      %p78 = scmp.eq.s32.totalorder %s21, 1
      %p79 = por %p77, %p78
      %p80 = scmp.ne.s32.totalorder %s69, %s70
      %p81 = scmp.eq.s32.totalorder %s21, 0
      %p82 = por %p80, %p81
      %p83 = scmp.ne.s32.totalorder %s69, %s70
      %p84 = scmp.eq.s32.totalorder %s22, 1
      %p85 = por %p83, %p84
      %p87 = scmp.ne.s32.totalorder %s70, %s86
      %p88 = scmp.eq.s32.totalorder %s22, 0
      %p89 = por %p87, %p88
      %s91 = sadd.s32 %s90, 1
      %p94 = scmp.eq.s32.totalorder %s16, 1
      %p95 = scmp.ne.s32.totalorder %s90, %s92
      %p96 = scmp.eq.s32.totalorder %s16, 0
      %p97 = por %p95, %p96
      %p98 = scmp.ne.s32.totalorder %s90, %s92
      %p99 = scmp.eq.s32.totalorder %s21, 1
      %p100 = por %p98, %p99
      %p101 = scmp.ne.s32.totalorder %s92, %s93
      %p102 = scmp.eq.s32.totalorder %s21, 0
      %p103 = por %p101, %p102
      %p104 = scmp.ne.s32.totalorder %s92, %s93
      %p105 = scmp.eq.s32.totalorder %s22, 1
      %p106 = por %p104, %p105
      %p108 = scmp.ne.s32.totalorder %s93, %s107
      %p109 = scmp.eq.s32.totalorder %s22, 0
      %p110 = por %p108, %p109
      %s111 = ssub.s32 %s23, %s35
      %s112 = ssub.s32 %s24, %s31
      %s113 = sor.u32 %s111, %s112
      %p114 = scmp.eq.s32.totalorder %s113, 0
      %s116 = sadd.s32 %s115, 1
      %s117 = scalar_select %p114, %s115, %s116
      %p120 = pneg %p114
      %p121 = scmp.eq.s32.totalorder %s16, 1
      %p122 = por %p120, %p121
      %p123 = scmp.ne.s32.totalorder %s115, %s118
      %p124 = scmp.eq.s32.totalorder %s16, 0
      %p125 = por %p123, %p124
      %p126 = scmp.ne.s32.totalorder %s115, %s118
      %p127 = scmp.eq.s32.totalorder %s21, 1
      %p128 = por %p126, %p127
      %p129 = scmp.ne.s32.totalorder %s118, %s119
      %p130 = scmp.eq.s32.totalorder %s21, 0
      %p131 = por %p129, %p130
      %p132 = scmp.ne.s32.totalorder %s118, %s119
      %p133 = scmp.eq.s32.totalorder %s22, 1
      %p134 = por %p132, %p133
      %p136 = scmp.ne.s32.totalorder %s119, %s135
      %p137 = scmp.eq.s32.totalorder %s22, 0
      %p138 = por %p136, %p137
      %p139 = scmp.le.s32.totalorder 1, %s16
      %p140 = scmp.lt.s32.totalorder %s16, 3
      %p141 = pnand %p139, %p140
      %p142 = pneg %p141
      // Predicated region
      $region9: #{tpu_custom_call.1} parent=5 // pred_check
        _
      $region10: #{tpu_custom_call.1} parent=5 // pred_check_branch
        %144 = sbr.rel (%p141) target = $region12
      $region11: #{tpu_custom_call.1} parent=5 // pred_region
        %s145 = ssub.s32 %s16, 1
        // Predicated region
        $region13: #{tpu_custom_call.1} parent=11 // pred_check
          %p146 = pneg %p82
        $region14: #{tpu_custom_call.1} parent=11 // pred_check_branch
          %148 = sbr.rel (%p146) target = $region16
        $region15: #{tpu_custom_call.1} parent=11 // pred_region
          %150 = vsyncadd [#allocation7], 0
          %s151 = smul.addr %s25, 2
          %s152 = scalar_lea.hbm %s1, %s151
          %s154 = sshll.u32 %s152, 4
          %s155 = int_to_ptr.hbm [resolvable:$true] %s154
          %s156 = sshll.u32 [#allocation6], 4
          %s157 = int_to_ptr.vmem [resolvable:$true] %s156
          %159 = dma.hbm_to_vmem [thread:$0]  %s155, 32, %s157, [#allocation7]
        $region16: #{tpu_custom_call.1} parent=11 // pred_fallthru
          _
        // Predicated region
        $region17: #{tpu_custom_call.1} parent=11 // pred_check
          %p160 = pneg %p103
        $region18: #{tpu_custom_call.1} parent=11 // pred_check_branch
          %162 = sbr.rel (%p160) target = $region20
        $region19: #{tpu_custom_call.1} parent=11 // pred_region
          %164 = vsyncadd [#allocation7], 0
          %s165 = sshll.u32 %s2, 4
          %s166 = int_to_ptr.hbm [resolvable:$true] %s165
          %s167 = sshll.u32 [#allocation8], 4
          %s168 = int_to_ptr.vmem [resolvable:$true] %s167
          %173 = dma.hbm_to_vmem [thread:$0]  %s166, 512, %s168, [#allocation7], 128, 128, 8
        $region20: #{tpu_custom_call.1} parent=11 // pred_fallthru
          _
      $region12: #{tpu_custom_call.1} parent=5 // pred_fallthru
        _
      %p174 = scmp.lt.s32.totalorder %s16, 2
      // Predicated region
      $region21: #{tpu_custom_call.1} parent=5 // pred_check
        %p175 = pneg %p174
      $region22: #{tpu_custom_call.1} parent=5 // pred_check_branch
        %177 = sbr.rel (%p175) target = $region24
      $region23: #{tpu_custom_call.1} parent=5 // pred_region
        // Predicated region
        $region25: #{tpu_custom_call.1} parent=23 // pred_check
          %p178 = pneg %p50
        $region26: #{tpu_custom_call.1} parent=23 // pred_check_branch
          %180 = sbr.rel (%p178) target = $region28
        $region27: #{tpu_custom_call.1} parent=23 // pred_region
          %s181 = sand.u32 %s40, 1
          %s182 = scalar_lea.sflag [#allocation4], %s181
          %s183 = sand.u32 %s40, 1
          %s184 = smul.addr %s183, 16
          %s185 = scalar_lea.vmem [#allocation3], %s184
          %s186 = smul.u32 2, %s23
          %188 = vsyncadd %s182, 0
          %s189 = smul.addr %s186, 2
          %s190 = sadd.s32 %s24, %s189
          %s191 = smul.addr %s190, 8
          %s192 = scalar_lea.hbm %s0, %s191
          %s193 = sshll.u32 %s192, 4
          %s194 = int_to_ptr.hbm [resolvable:$true] %s193
          %s195 = sshll.u32 %s185, 4
          %s196 = int_to_ptr.vmem [resolvable:$true] %s195
          %201 = dma.hbm_to_vmem [thread:$0]  %s194, 256, %s196, %s182, 256, 128, 8
        $region28: #{tpu_custom_call.1} parent=23 // pred_fallthru
          _
      $region24: #{tpu_custom_call.1} parent=5 // pred_fallthru
        _
      %p202 = scmp.le.s32.totalorder 1, %s16
      %p203 = scmp.lt.s32.totalorder %s16, 3
      %p204 = pnand %p202, %p203
      %p205 = pneg %p204
      // Predicated region
      $region29: #{tpu_custom_call.1} parent=5 // pred_check
        _
      $region30: #{tpu_custom_call.1} parent=5 // pred_check_branch
        %207 = sbr.rel (%p204) target = $region32
      $region31: #{tpu_custom_call.1} parent=5 // pred_region
        %s208 = ssub.s32 %s16, 1
        %s209 = sand.u32 %s43, 1
        %s210 = scalar_lea.sflag [#allocation4], %s209
        %s211 = sand.u32 %s43, 1
        %s212 = smul.addr %s211, 16
        %s213 = scalar_lea.vmem [#allocation3], %s212
        // Predicated region
        $region33: #{tpu_custom_call.1} parent=31 // pred_check
          %p214 = pneg %p56
        $region34: #{tpu_custom_call.1} parent=31 // pred_check_branch
          %216 = sbr.rel (%p214) target = $region36
        $region35: #{tpu_custom_call.1} parent=31 // pred_region
          %218 = dma.done %s210, 256
        $region36: #{tpu_custom_call.1} parent=31 // pred_fallthru
          _
        // Predicated region
        $region37: #{tpu_custom_call.1} parent=31 // pred_check
          %p219 = pneg %p82
        $region38: #{tpu_custom_call.1} parent=31 // pred_check_branch
          %221 = sbr.rel (%p219) target = $region40
        $region39: #{tpu_custom_call.1} parent=31 // pred_region
          %223 = dma.done [#allocation7], 32
        $region40: #{tpu_custom_call.1} parent=31 // pred_fallthru
          _
        // Predicated region
        $region41: #{tpu_custom_call.1} parent=31 // pred_check
          %p224 = pneg %p103
        $region42: #{tpu_custom_call.1} parent=31 // pred_check_branch
          %226 = sbr.rel (%p224) target = $region44
        $region43: #{tpu_custom_call.1} parent=31 // pred_region
          %228 = dma.done [#allocation7], 512
        $region44: #{tpu_custom_call.1} parent=31 // pred_fallthru
          _
        %s229 = sand.u32 %s43, 1
        %s230 = scalar_lea.sflag [#allocation4], %s229
        %s231 = sand.u32 %s43, 1
        %s232 = smul.addr %s231, 16
        %s233 = scalar_lea.vmem [#allocation3], %s232
        %p234 = pneg %p56
        %p235 = pneg %p53
        %p236 = pneg %p82
        %p237 = pneg %p79
        %p238 = pneg %p103
        %p239 = pneg %p100
        %p240 = pneg %p131
        %p241 = pneg %p128
        %s242 = sand.u32 %s118, 1
        %s243 = scalar_lea.sflag [#allocation5], %s242
        %s244 = sand.u32 %s118, 1
        %s245 = smul.addr %s244, 16
        %s246 = scalar_lea.vmem [#allocation9], %s245
        %s247 = smul.u32 2, %s25
        %s248 = smul.u32 2, %s25
        %p249 = scmp.eq.s32.totalorder %s26, 0
        // Predicated region
        $region45: #{tpu_custom_call.1} parent=31 // pred_check
          %p250 = pneg %p249
        $region46: #{tpu_custom_call.1} parent=31 // pred_check_branch
          %252 = sbr.rel (%p250) target = $region48
        $region47: #{tpu_custom_call.1} parent=31 // pred_region
          %v253 = vld [vmem:[#allocation6] sm:$0x3]
          %vm254 = vcmask 254976
          %255 = vst.msk [vmem:[#allocation2] sm:$0x3] %vm254, %v253
        $region48: #{tpu_custom_call.1} parent=31 // pred_fallthru
          _
        %v256 = vld [vmem:[#allocation8] sm:$0xff]
        %v257 = vld [vmem:[#allocation8 + $0x8] sm:$0xff]
        %v258 = vld [vmem:[#allocation8 + $0x10] sm:$0xff]
        %v259 = vld [vmem:[#allocation8 + $0x18] sm:$0xff]
        %v260 = vld [vmem:[#allocation2] sm:$0x3]
        %v261 = vld [vmem:[%s213] sm:$0x1]
        %v262 = vld [vmem:[%s213 + $0x8] sm:$0x1]
        %vm263 = vcmask 261120
        %v265 = vsel %vm263, %v260, 0
        %267 = vmatpush.msra.mxu0 0.0
        %268 = vmatpush.msra.mxu0 0.0
        %269 = vmatpush.msra.mxu0 0.0
        %270 = vmatpush.msra.mxu0 0.0
        %271 = vmatpush.msra.mxu0 0.0
        %272 = vmatpush.msra.mxu0 0.0
        %273 = vmatpush.msra.mxu0 0.0
        %274 = vmatpush.msra.mxu0 0.0
        %275 = vmatpush.msra.mxu0 0.0
        %276 = vmatpush.msra.mxu0 0.0
        %277 = vmatpush.msra.mxu0 0.0
        %278 = vmatpush.msra.mxu0 0.0
        %279 = vmatpush.msra.mxu0 %v259
        %280 = vmatpush.msra.mxu0 %v258
        %281 = vmatpush.msra.mxu0 %v257
        %282 = vmatpush.msra.mxu0 %v256
        %283 = vmatmul.f32.gmra.mxu0 %v265
        %v284 = vpop.f32.mrf.mxu0
        %v285 = vadd.f32 0.0, %v284
        %286 = vdwg.mxu0
        %v288 = vrot.slane %v285, 1
        %v291 = vadd.f32 %v261, %v285
        %v292 = vadd.f32 %v262, %v288
        %v293 = vtanh.pop %v291
        %v294 = vtanh.pop %v292
        %vm295 = vcmask 253952
        %296 = vst.msk [vmem:[%s246] sm:$0x1] %vm295, %v293
        %297 = vst.msk [vmem:[%s246 + $0x8] sm:$0x1] %vm295, %v294
        %v298 = vld [vmem:[%s213 + $0x1] sm:$0x1]
        %v299 = vld [vmem:[%s213 + $0x9] sm:$0x1]
        %v302 = vrot.slane %v294, 7
        %vm303 = vcmask 1041409
        %v304 = vsel %vm303, %v302, %v293
        %v305 = vsel %vm263, %v304, 0
        %307 = vmatpush.msra.mxu0 0.0
        %308 = vmatpush.msra.mxu0 0.0
        %309 = vmatpush.msra.mxu0 0.0
        %310 = vmatpush.msra.mxu0 0.0
        %311 = vmatpush.msra.mxu0 0.0
        %312 = vmatpush.msra.mxu0 0.0
        %313 = vmatpush.msra.mxu0 0.0
        %314 = vmatpush.msra.mxu0 0.0
        %315 = vmatpush.msra.mxu0 0.0
        %316 = vmatpush.msra.mxu0 0.0
        %317 = vmatpush.msra.mxu0 0.0
        %318 = vmatpush.msra.mxu0 0.0
        %319 = vmatpush.msra.mxu0 %v259
        %320 = vmatpush.msra.mxu0 %v258
        %321 = vmatpush.msra.mxu0 %v257
        %322 = vmatpush.msra.mxu0 %v256
        %323 = vmatmul.f32.gmra.mxu0 %v305
        %v324 = vpop.f32.mrf.mxu0
        %v325 = vadd.f32 0.0, %v324
        %326 = vdwg.mxu0
        %v328 = vrot.slane %v325, 1
        %v331 = vadd.f32 %v298, %v325
        %v332 = vadd.f32 %v299, %v328
        %v333 = vtanh.pop %v331
        %v334 = vtanh.pop %v332
        %335 = vst.msk [vmem:[%s246 + $0x1] sm:$0x1] %vm295, %v333
        %336 = vst.msk [vmem:[%s246 + $0x9] sm:$0x1] %vm295, %v334
        %v337 = vld [vmem:[%s213 + $0x2] sm:$0x1]
        %v338 = vld [vmem:[%s213 + $0xa] sm:$0x1]
        %v341 = vrot.slane %v334, 7
        %v342 = vsel %vm303, %v341, %v333
        %v343 = vsel %vm263, %v342, 0
        %345 = vmatpush.msra.mxu0 0.0
        %346 = vmatpush.msra.mxu0 0.0
        %347 = vmatpush.msra.mxu0 0.0
        %348 = vmatpush.msra.mxu0 0.0
        %349 = vmatpush.msra.mxu0 0.0
        %350 = vmatpush.msra.mxu0 0.0
        %351 = vmatpush.msra.mxu0 0.0
        %352 = vmatpush.msra.mxu0 0.0
        %353 = vmatpush.msra.mxu0 0.0
        %354 = vmatpush.msra.mxu0 0.0
        %355 = vmatpush.msra.mxu0 0.0
        %356 = vmatpush.msra.mxu0 0.0
        %357 = vmatpush.msra.mxu0 %v259
        %358 = vmatpush.msra.mxu0 %v258
        %359 = vmatpush.msra.mxu0 %v257
        %360 = vmatpush.msra.mxu0 %v256
        %361 = vmatmul.f32.gmra.mxu0 %v343
        %v362 = vpop.f32.mrf.mxu0
        %v363 = vadd.f32 0.0, %v362
        %364 = vdwg.mxu0
        %v366 = vrot.slane %v363, 1
        %v369 = vadd.f32 %v337, %v363
        %v370 = vadd.f32 %v338, %v366
        %v371 = vtanh.pop %v369
        %v372 = vtanh.pop %v370
        %373 = vst.msk [vmem:[%s246 + $0x2] sm:$0x1] %vm295, %v371
        %374 = vst.msk [vmem:[%s246 + $0xa] sm:$0x1] %vm295, %v372
        %v375 = vld [vmem:[%s213 + $0x3] sm:$0x1]
        %v376 = vld [vmem:[%s213 + $0xb] sm:$0x1]
        %v379 = vrot.slane %v372, 7
        %v380 = vsel %vm303, %v379, %v371
        %v381 = vsel %vm263, %v380, 0
        %383 = vmatpush.msra.mxu0 0.0
        %384 = vmatpush.msra.mxu0 0.0
        %385 = vmatpush.msra.mxu0 0.0
        %386 = vmatpush.msra.mxu0 0.0
        %387 = vmatpush.msra.mxu0 0.0
        %388 = vmatpush.msra.mxu0 0.0
        %389 = vmatpush.msra.mxu0 0.0
        %390 = vmatpush.msra.mxu0 0.0
        %391 = vmatpush.msra.mxu0 0.0
        %392 = vmatpush.msra.mxu0 0.0
        %393 = vmatpush.msra.mxu0 0.0
        %394 = vmatpush.msra.mxu0 0.0
        %395 = vmatpush.msra.mxu0 %v259
        %396 = vmatpush.msra.mxu0 %v258
        %397 = vmatpush.msra.mxu0 %v257
        %398 = vmatpush.msra.mxu0 %v256
        %399 = vmatmul.f32.gmra.mxu0 %v381
        %v400 = vpop.f32.mrf.mxu0
        %v401 = vadd.f32 0.0, %v400
        %402 = vdwg.mxu0
        %v404 = vrot.slane %v401, 1
        %v407 = vadd.f32 %v375, %v401
        %v408 = vadd.f32 %v376, %v404
        %v409 = vtanh.pop %v407
        %v410 = vtanh.pop %v408
        %411 = vst.msk [vmem:[%s246 + $0x3] sm:$0x1] %vm295, %v409
        %412 = vst.msk [vmem:[%s246 + $0xb] sm:$0x1] %vm295, %v410
        %v413 = vld [vmem:[%s213 + $0x4] sm:$0x1]
        %v414 = vld [vmem:[%s213 + $0xc] sm:$0x1]
        %v417 = vrot.slane %v410, 7
        %v418 = vsel %vm303, %v417, %v409
        %v419 = vsel %vm263, %v418, 0
        %421 = vmatpush.msra.mxu0 0.0
        %422 = vmatpush.msra.mxu0 0.0
        %423 = vmatpush.msra.mxu0 0.0
        %424 = vmatpush.msra.mxu0 0.0
        %425 = vmatpush.msra.mxu0 0.0
        %426 = vmatpush.msra.mxu0 0.0
        %427 = vmatpush.msra.mxu0 0.0
        %428 = vmatpush.msra.mxu0 0.0
        %429 = vmatpush.msra.mxu0 0.0
        %430 = vmatpush.msra.mxu0 0.0
        %431 = vmatpush.msra.mxu0 0.0
        %432 = vmatpush.msra.mxu0 0.0
        %433 = vmatpush.msra.mxu0 %v259
        %434 = vmatpush.msra.mxu0 %v258
        %435 = vmatpush.msra.mxu0 %v257
        %436 = vmatpush.msra.mxu0 %v256
        %437 = vmatmul.f32.gmra.mxu0 %v419
        %v438 = vpop.f32.mrf.mxu0
        %v439 = vadd.f32 0.0, %v438
        %440 = vdwg.mxu0
        %v442 = vrot.slane %v439, 1
        %v445 = vadd.f32 %v413, %v439
        %v446 = vadd.f32 %v414, %v442
        %v447 = vtanh.pop %v445
        %v448 = vtanh.pop %v446
        %449 = vst.msk [vmem:[%s246 + $0x4] sm:$0x1] %vm295, %v447
        %450 = vst.msk [vmem:[%s246 + $0xc] sm:$0x1] %vm295, %v448
        %v451 = vld [vmem:[%s213 + $0x5] sm:$0x1]
        %v452 = vld [vmem:[%s213 + $0xd] sm:$0x1]
        %v455 = vrot.slane %v448, 7
        %v456 = vsel %vm303, %v455, %v447
        %v457 = vsel %vm263, %v456, 0
        %459 = vmatpush.msra.mxu0 0.0
        %460 = vmatpush.msra.mxu0 0.0
        %461 = vmatpush.msra.mxu0 0.0
        %462 = vmatpush.msra.mxu0 0.0
        %463 = vmatpush.msra.mxu0 0.0
        %464 = vmatpush.msra.mxu0 0.0
        %465 = vmatpush.msra.mxu0 0.0
        %466 = vmatpush.msra.mxu0 0.0
        %467 = vmatpush.msra.mxu0 0.0
        %468 = vmatpush.msra.mxu0 0.0
        %469 = vmatpush.msra.mxu0 0.0
        %470 = vmatpush.msra.mxu0 0.0
        %471 = vmatpush.msra.mxu0 %v259
        %472 = vmatpush.msra.mxu0 %v258
        %473 = vmatpush.msra.mxu0 %v257
        %474 = vmatpush.msra.mxu0 %v256
        %475 = vmatmul.f32.gmra.mxu0 %v457
        %v476 = vpop.f32.mrf.mxu0
        %v477 = vadd.f32 0.0, %v476
        %478 = vdwg.mxu0
        %v480 = vrot.slane %v477, 1
        %v483 = vadd.f32 %v451, %v477
        %v484 = vadd.f32 %v452, %v480
        %v485 = vtanh.pop %v483
        %v486 = vtanh.pop %v484
        %487 = vst.msk [vmem:[%s246 + $0x5] sm:$0x1] %vm295, %v485
        %488 = vst.msk [vmem:[%s246 + $0xd] sm:$0x1] %vm295, %v486
        %v489 = vld [vmem:[%s213 + $0x6] sm:$0x1]
        %v490 = vld [vmem:[%s213 + $0xe] sm:$0x1]
        %v493 = vrot.slane %v486, 7
        %v494 = vsel %vm303, %v493, %v485
        %v495 = vsel %vm263, %v494, 0
        %497 = vmatpush.msra.mxu0 0.0
        %498 = vmatpush.msra.mxu0 0.0
        %499 = vmatpush.msra.mxu0 0.0
        %500 = vmatpush.msra.mxu0 0.0
        %501 = vmatpush.msra.mxu0 0.0
        %502 = vmatpush.msra.mxu0 0.0
        %503 = vmatpush.msra.mxu0 0.0
        %504 = vmatpush.msra.mxu0 0.0
        %505 = vmatpush.msra.mxu0 0.0
        %506 = vmatpush.msra.mxu0 0.0
        %507 = vmatpush.msra.mxu0 0.0
        %508 = vmatpush.msra.mxu0 0.0
        %509 = vmatpush.msra.mxu0 %v259
        %510 = vmatpush.msra.mxu0 %v258
        %511 = vmatpush.msra.mxu0 %v257
        %512 = vmatpush.msra.mxu0 %v256
        %513 = vmatmul.f32.gmra.mxu0 %v495
        %v514 = vpop.f32.mrf.mxu0
        %v515 = vadd.f32 0.0, %v514
        %516 = vdwg.mxu0
        %v518 = vrot.slane %v515, 1
        %v521 = vadd.f32 %v489, %v515
        %v522 = vadd.f32 %v490, %v518
        %v523 = vtanh.pop %v521
        %v524 = vtanh.pop %v522
        %525 = vst.msk [vmem:[%s246 + $0x6] sm:$0x1] %vm295, %v523
        %526 = vst.msk [vmem:[%s246 + $0xe] sm:$0x1] %vm295, %v524
        %v527 = vld [vmem:[%s213 + $0x7] sm:$0x1]
        %v528 = vld [vmem:[%s213 + $0xf] sm:$0x1]
        %v531 = vrot.slane %v524, 7
        %v532 = vsel %vm303, %v531, %v523
        %v533 = vsel %vm263, %v532, 0
        %535 = vmatpush.msra.mxu0 0.0
        %536 = vmatpush.msra.mxu0 0.0
        %537 = vmatpush.msra.mxu0 0.0
        %538 = vmatpush.msra.mxu0 0.0
        %539 = vmatpush.msra.mxu0 0.0
        %540 = vmatpush.msra.mxu0 0.0
        %541 = vmatpush.msra.mxu0 0.0
        %542 = vmatpush.msra.mxu0 0.0
        %543 = vmatpush.msra.mxu0 0.0
        %544 = vmatpush.msra.mxu0 0.0
        %545 = vmatpush.msra.mxu0 0.0
        %546 = vmatpush.msra.mxu0 0.0
        %547 = vmatpush.msra.mxu0 %v259
        %548 = vmatpush.msra.mxu0 %v258
        %549 = vmatpush.msra.mxu0 %v257
        %550 = vmatpush.msra.mxu0 %v256
        %551 = vmatmul.f32.gmra.mxu0 %v533
        %v552 = vpop.f32.mrf.mxu0
        %v553 = vadd.f32 0.0, %v552
        %554 = vdwg.mxu0
        %v556 = vrot.slane %v553, 1
        %v559 = vadd.f32 %v527, %v553
        %v560 = vadd.f32 %v528, %v556
        %v561 = vtanh.pop %v559
        %v562 = vtanh.pop %v560
        %563 = vst.msk [vmem:[%s246 + $0x7] sm:$0x1] %vm295, %v561
        %564 = vst.msk [vmem:[%s246 + $0xf] sm:$0x1] %vm295, %v562
        %v567 = vrot.slane %v562, 7
        %v568 = vsel %vm303, %v567, %v561
        %vm570 = vcmask 254976
        %571 = vst.msk [vmem:[#allocation2] sm:$0x3] %vm570, %v568
        %s572 = sand.u32 %s118, 1
        %s573 = scalar_lea.sflag [#allocation5], %s572
        %s574 = sand.u32 %s118, 1
        %s575 = smul.addr %s574, 16
        %s576 = scalar_lea.vmem [#allocation9], %s575
        // Predicated region
        $region49: #{tpu_custom_call.1} parent=31 // pred_check
          %p577 = pneg %p128
        $region50: #{tpu_custom_call.1} parent=31 // pred_check_branch
          %579 = sbr.rel (%p577) target = $region52
        $region51: #{tpu_custom_call.1} parent=31 // pred_region
          %s580 = smul.u32 2, %s25
          %582 = vsyncadd %s573, 0
          %s583 = smul.addr %s580, 2
          %s584 = sadd.s32 %s26, %s583
          %s585 = smul.addr %s584, 8
          %s586 = scalar_lea.hbm %s3, %s585
          %s587 = sshll.u32 %s576, 4
          %s588 = int_to_ptr.vmem [resolvable:$true] %s587
          %s589 = sshll.u32 %s586, 4
          %s590 = int_to_ptr.hbm [resolvable:$true] %s589
          %595 = dma.vmem_to_hbm [thread:$0]  %s588, 256, %s590, %s573, 128, 256, 8
        $region52: #{tpu_custom_call.1} parent=31 // pred_fallthru
          _
      $region32: #{tpu_custom_call.1} parent=5 // pred_fallthru
        _
      %p596 = scmp.le.s32.totalorder 2, %s16
      // Predicated region
      $region53: #{tpu_custom_call.1} parent=5 // pred_check
        %p597 = pneg %p596
      $region54: #{tpu_custom_call.1} parent=5 // pred_check_branch
        %599 = sbr.rel (%p597) target = $region56
      $region55: #{tpu_custom_call.1} parent=5 // pred_region
        %s600 = ssub.s32 %s16, 2
        // Predicated region
        $region57: #{tpu_custom_call.1} parent=55 // pred_check
          %p601 = pneg %p134
        $region58: #{tpu_custom_call.1} parent=55 // pred_check_branch
          %603 = sbr.rel (%p601) target = $region60
        $region59: #{tpu_custom_call.1} parent=55 // pred_region
          %s604 = sand.u32 %s119, 1
          %s605 = scalar_lea.sflag [#allocation5], %s604
          %s606 = sand.u32 %s119, 1
          %s607 = smul.addr %s606, 16
          %s608 = scalar_lea.vmem [#allocation9], %s607
          %610 = dma.done %s605, 256
        $region60: #{tpu_custom_call.1} parent=55 // pred_fallthru
          _
      $region56: #{tpu_custom_call.1} parent=5 // pred_fallthru
        _
    $region6: #{tpu_custom_call.1} parent=1 // loop_footer
      %s20 = sadd.s32 1, %s16
    $region7: #{tpu_custom_call.1} parent=1 // loop_footer_branch
      %15 = sbr.rel target = $region3
    $region8: #{tpu_custom_call.1} parent=1 // loop_exit
      _
    %611 = vsyncpa [#allocation4], 1
    %s612 = scalar_lea.sflag [#allocation4], 1
    %613 = vsyncpa %s612, 1
    %614 = vsyncpa [#allocation7], 1
    %615 = vsyncpa [#allocation5], 1
    %s616 = scalar_lea.sflag [#allocation5], 1
    %617 = vsyncpa %s616, 1

</llo_original>
